<compile_context>
chip_gen: v7x
topology: tpu7x:2x2x1
jax: 0.10.0
libtpu: 0.0.40
codegen_flags: <defaults>
</compile_context>

<pallas_src>
import math
import functools

import jax
import jax.numpy as jnp
from jax import lax
from jax.experimental import pallas as pl
from jax.experimental.pallas import tpu as pltpu


# ----------------------------------------------------------------------------
# Fused Pallas kernel: projections + masked attention + head merge + W_o
# ----------------------------------------------------------------------------

def _mha_fused_kernel(vlen_ref, q_ref, k_ref, v_ref, wqkv_ref, wo_ref, o_ref,
                      *, num_heads, mxu_dtype):
    """One grid step == one batch item; all heads processed inside the step.

    vlen_ref : [B] int32 (SMEM, scalar prefetch)
    q/k/v_ref: [1, S, C]  mxu_dtype blocks
    wqkv_ref : [C, 3*N]   mxu_dtype (W_q | W_k | W_v concatenated)
    wo_ref   : [N, N]     mxu_dtype
    o_ref    : [1, S, N]  float32
    """
    b = pl.program_id(0)
    S = q_ref.shape[1]
    N = wo_ref.shape[0]
    d = N // num_heads
    inv_sqrt_d = jnp.float32(1.0 / math.sqrt(d))

    x_q = q_ref[0]                       # [S, C]
    x_k = k_ref[0]
    x_v = v_ref[0]
    w_qkv = wqkv_ref[...]                # [C, 3N]
    w_o = wo_ref[...]                    # [N, N]

    # Fused Q/K/V projections (bf16 operands, f32 accumulation on the MXU).
    q_proj = jnp.dot(x_q, w_qkv[:, 0:N], preferred_element_type=jnp.float32)
    k_proj = jnp.dot(x_k, w_qkv[:, N:2 * N], preferred_element_type=jnp.float32)
    v_proj = jnp.dot(x_v, w_qkv[:, 2 * N:3 * N], preferred_element_type=jnp.float32)

    # Key-position mask (same valid length for every query row of this batch,
    # matching masked_softmax with 1-D valid_lens).
    vlen = vlen_ref[b]
    col_ids = lax.broadcasted_iota(jnp.int32, (S, S), 1)
    key_mask = col_ids < vlen
    neg_big = jnp.float32(-1000000.0)

    # Head split/merge happens entirely in-kernel via static lane slices;
    # the loop over heads is a static (unrolled) Python loop.
    head_outs = []
    for h in range(num_heads):
        qh = q_proj[:, h * d:(h + 1) * d].astype(mxu_dtype)   # [S, d]
        kh = k_proj[:, h * d:(h + 1) * d].astype(mxu_dtype)   # [S, d]
        vh = v_proj[:, h * d:(h + 1) * d].astype(mxu_dtype)   # [S, d]

        # scores[i, j] = q_i . k_j / sqrt(d)  (contract last dims; no k.T).
        scores = lax.dot_general(qh, kh, (((1,), (1,)), ((), ())),
                                 preferred_element_type=jnp.float32)
        scores = scores * inv_sqrt_d
        scores = jnp.where(key_mask, scores, neg_big)

        # Masked softmax in f32 (row max subtraction for stability).
        m = jnp.max(scores, axis=-1, keepdims=True)
        e = jnp.exp(scores - m)
        ssum = jnp.sum(e, axis=-1, keepdims=True)
        p = e * pl.reciprocal(ssum, approx=True)

        # TODO(synk): dropout on attention weights not applied (eval mode / p=0.0).
        head_outs.append(jnp.dot(p.astype(mxu_dtype), vh,
                                 preferred_element_type=jnp.float32))

    out_concat = jnp.concatenate(head_outs, axis=-1)          # [S, N] f32
    o_ref[0] = jnp.dot(out_concat.astype(mxu_dtype), w_o,
                       preferred_element_type=jnp.float32)


# ----------------------------------------------------------------------------
# Forward wrapper
# ----------------------------------------------------------------------------

def multi_head_attention_forward(params, queries, keys, values, valid_lens,
                                 num_heads, mxu_dtype=jnp.bfloat16):
    """queries/keys/values: NCHW [B, C, H, W]; valid_lens: [B] int32 or None."""
    B, C, H, W = queries.shape
    S = H * W
    N = params["W_q"].shape[1]
    d = N // num_heads

    # NCHW -> [B, S, C] (same permute the PyTorch module performs), cast MXU
    # operands to bf16 once in the wrapper (halves activation/weight DMA).
    def to_seq(x):
        return jnp.transpose(x, (0, 2, 3, 1)).reshape(B, S, C)

    q_seq = to_seq(queries).astype(mxu_dtype)
    k_seq = to_seq(keys).astype(mxu_dtype)
    v_seq = to_seq(values).astype(mxu_dtype)

    # Fuse the three projection weights into one lane-dense [C, 3N] slab.
    w_qkv = jnp.concatenate([params["W_q"], params["W_k"], params["W_v"]],
                            axis=1).astype(mxu_dtype)
    w_o = params["W_o"].astype(mxu_dtype)

    if valid_lens is None:
        vlens = jnp.full((B,), S, dtype=jnp.int32)
    else:
        vlens = valid_lens.astype(jnp.int32)

    # Advisory cost estimate for XLA's scheduler.
    flops = B * (3 * 2 * S * C * N                   # projections
                 + num_heads * 2 * (2 * S * S * d)   # scores + p@v
                 + 2 * S * N * N)                    # output projection
    transcendentals = B * num_heads * S * S          # exp in softmax
    bytes_accessed = (3 * B * S * C * 2              # q/k/v slabs (bf16)
                      + (C * 3 * N + N * N) * 2      # weights (bf16)
                      + B * S * N * 4                # output (f32)
                      + B * 4)                       # valid_lens

    block_in = pl.BlockSpec((1, S, C), lambda b, vl: (b, 0, 0))

    kernel = functools.partial(_mha_fused_kernel,
                               num_heads=num_heads, mxu_dtype=mxu_dtype)

    out = pl.pallas_call(
        kernel,
        out_shape=jax.ShapeDtypeStruct((B, S, N), jnp.float32),
        grid_spec=pltpu.PrefetchScalarGridSpec(
            num_scalar_prefetch=1,
            grid=(B,),
            in_specs=[
                block_in,                                        # queries
                block_in,                                        # keys
                block_in,                                        # values
                pl.BlockSpec((C, 3 * N), lambda b, vl: (0, 0)),  # W_qkv
                pl.BlockSpec((N, N), lambda b, vl: (0, 0)),      # W_o
            ],
            out_specs=pl.BlockSpec((1, S, N), lambda b, vl: (b, 0, 0)),
        ),
        compiler_params=pltpu.CompilerParams(
            dimension_semantics=("parallel",),
            # Modest explicit limit; per-step blocks here are tiny.  For large
            # S, re-derive tiling with the v7x 64 MiB / v5e 16 MiB budgets in
            # mind (scores scratch grows as S^2).
            vmem_limit_bytes=32 * 1024 * 1024,
        ),
        cost_estimate=pl.CostEstimate(flops=flops,
                                      transcendentals=transcendentals,
                                      bytes_accessed=bytes_accessed),
    )(vlens, q_seq, k_seq, v_seq, w_qkv, w_o)

    # [B, S, N] -> [B, N, H, W]
    return jnp.transpose(out.reshape(B, H, W, N), (0, 3, 1, 2))


# ----------------------------------------------------------------------------
# References for self-checking
# ----------------------------------------------------------------------------

def transpose_qkv(x, num_heads):
    B, S, Hd = x.shape
    x = x.reshape(B, S, num_heads, Hd // num_heads)
    x = jnp.transpose(x, (0, 2, 1, 3))
    return x.reshape(B * num_heads, S, Hd // num_heads)


def transpose_output(x, num_heads):
    BH, S, d = x.shape
    B = BH // num_heads
    x = x.reshape(B, num_heads, S, d)
    x = jnp.transpose(x, (0, 2, 1, 3))
    return x.reshape(B, S, num_heads * d)


def reference_forward_f32(params, queries, keys, values, valid_lens, num_heads):
    """Pure-f32 JAX reference mirroring the PyTorch module."""
    B, C, H, W = queries.shape
    S = H * W

    def to_seq(x):
        return jnp.transpose(x, (0, 2, 3, 1)).reshape(B, S, -1)

    q = to_seq(queries) @ params["W_q"]
    k = to_seq(keys) @ params["W_k"]
    v = to_seq(values) @ params["W_v"]

    qh = transpose_qkv(q, num_heads)
    kh = transpose_qkv(k, num_heads)
    vh = transpose_qkv(v, num_heads)

    d = qh.shape[-1]
    scores = jnp.einsum("bqd,bkd->bqk", qh, kh) / math.sqrt(d)

    if valid_lens is not None:
        vlens_bh = jnp.repeat(valid_lens.astype(jnp.int32), num_heads, axis=0)
        col = jnp.arange(S)[None, None, :]
        scores = jnp.where(col < vlens_bh[:, None, None], scores, -1000000.0)

    p = jax.nn.softmax(scores, axis=-1)
    out = jnp.einsum("bqk,bkd->bqd", p, vh)
    out_concat = transpose_output(out, num_heads) @ params["W_o"]
    return jnp.transpose(out_concat.reshape(B, H, W, -1), (0, 3, 1, 2))


def reference_forward_matched(params, queries, keys, values, valid_lens,
                              num_heads, mxu_dtype=jnp.bfloat16):
    """Reference matching the kernel's precision policy (bf16 MXU operands,
    f32 accumulation & softmax) for a tight numerical comparison."""
    B, C, H, W = queries.shape
    S = H * W
    N = params["W_q"].shape[1]
    d = N // num_heads

    def to_seq(x):
        return jnp.transpose(x, (0, 2, 3, 1)).reshape(B, S, C)

    q_seq = to_seq(queries).astype(mxu_dtype)
    k_seq = to_seq(keys).astype(mxu_dtype)
    v_seq = to_seq(values).astype(mxu_dtype)
    w_q = params["W_q"].astype(mxu_dtype)
    w_k = params["W_k"].astype(mxu_dtype)
    w_v = params["W_v"].astype(mxu_dtype)
    w_o = params["W_o"].astype(mxu_dtype)

    q_proj = jnp.einsum("bsc,cn->bsn", q_seq, w_q, preferred_element_type=jnp.float32)
    k_proj = jnp.einsum("bsc,cn->bsn", k_seq, w_k, preferred_element_type=jnp.float32)
    v_proj = jnp.einsum("bsc,cn->bsn", v_seq, w_v, preferred_element_type=jnp.float32)

    if valid_lens is None:
        vlens = jnp.full((B,), S, dtype=jnp.int32)
    else:
        vlens = valid_lens.astype(jnp.int32)
    col = jnp.arange(S, dtype=jnp.int32)
    mask = col[None, None, :] < vlens[:, None, None]

    outs = []
    for h in range(num_heads):
        qh = q_proj[..., h * d:(h + 1) * d].astype(mxu_dtype)
        kh = k_proj[..., h * d:(h + 1) * d].astype(mxu_dtype)
        vh = v_proj[..., h * d:(h + 1) * d].astype(mxu_dtype)
        scores = jnp.einsum("bqd,bkd->bqk", qh, kh,
                            preferred_element_type=jnp.float32) / math.sqrt(d)
        scores = jnp.where(mask, scores, jnp.float32(-1000000.0))
        p = jax.nn.softmax(scores, axis=-1)
        outs.append(jnp.einsum("bqk,bkd->bqd", p.astype(mxu_dtype), vh,
                               preferred_element_type=jnp.float32))
    out_concat = jnp.concatenate(outs, axis=-1).astype(mxu_dtype)
    final = jnp.einsum("bsn,nm->bsm", out_concat, w_o,
                       preferred_element_type=jnp.float32)
    return jnp.transpose(final.reshape(B, H, W, N), (0, 3, 1, 2))


# ----------------------------------------------------------------------------
# Main
# ----------------------------------------------------------------------------

if __name__ == "__main__":
    # Small shapes: batch=2, channels=4, spatial=4x4 -> seq len 16,
    # num_hiddens=32, num_heads=4, head_dim=8, dropout=0.0, bias=False.
    B, C, H, W = 2, 4, 4, 4
    num_hiddens, num_heads = 32, 4

    key = jax.random.PRNGKey(0)
    k_q, k_k, k_v, kw_q, kw_k, kw_v, kw_o = jax.random.split(key, 7)

    queries = jax.random.normal(k_q, (B, C, H, W), dtype=jnp.float32)
    keys_in = jax.random.normal(k_k, (B, C, H, W), dtype=jnp.float32)
    values_in = jax.random.normal(k_v, (B, C, H, W), dtype=jnp.float32)
    valid_lens = jnp.array([5, 12], dtype=jnp.int32)

    # Deterministic parameter init (Linear weights stored as [in, out]).
    def init_w(k, fan_in, fan_out):
        bound = 1.0 / math.sqrt(fan_in)
        return jax.random.uniform(k, (fan_in, fan_out), jnp.float32,
                                  minval=-bound, maxval=bound)

    params = {
        "W_q": init_w(kw_q, C, num_hiddens),
        "W_k": init_w(kw_k, C, num_hiddens),
        "W_v": init_w(kw_v, C, num_hiddens),
        "W_o": init_w(kw_o, num_hiddens, num_hiddens),
    }

    fwd = jax.jit(functools.partial(multi_head_attention_forward,
                                    num_heads=num_heads))
    out = fwd(params, queries, keys_in, values_in, valid_lens)
    out = jax.block_until_ready(out)
    assert out.shape == (B, num_hiddens, H, W)

    # Tight check vs a precision-matched (bf16-MXU / f32-accumulate) reference.
    ref_matched = reference_forward_matched(params, queries, keys_in, values_in,
                                            valid_lens, num_heads)
    assert jnp.allclose(out, ref_matched, atol=2e-3, rtol=2e-3), \
        "mismatch vs precision-matched reference"

    # Loose check vs the pure-f32 PyTorch-mirroring reference (tolerance
    # loosened because MXU operands are bf16, per review guidance).
    ref_f32 = reference_forward_f32(params, queries, keys_in, values_in,
                                    valid_lens, num_heads)
    assert jnp.allclose(out, ref_f32, atol=1e-1, rtol=1e-1), \
        "mismatch vs f32 reference"

    print("KERNEL_OK")
</pallas_src>

<mosaic_0001>
module attributes {stable_mosaic.version = 11 : i64} {
  func.func @_mha_fused_kernel(%arg0: i32, %arg1: memref<2xi32, #tpu.memory_space<smem>>, %arg2: memref<1x16x4xbf16, #tpu.memory_space<vmem>>, %arg3: memref<1x16x4xbf16, #tpu.memory_space<vmem>>, %arg4: memref<1x16x4xbf16, #tpu.memory_space<vmem>>, %arg5: memref<4x96xbf16, #tpu.memory_space<vmem>>, %arg6: memref<32x32xbf16, #tpu.memory_space<vmem>>, %arg7: memref<1x16x32xf32, #tpu.memory_space<vmem>>) attributes {dimension_semantics = [#tpu.dimension_semantics<parallel>], iteration_bounds = array<i64: 2>, scalar_prefetch = 1 : i64, scratch_operands = 0 : i64, tpu.core_type = #tpu.core_type<tc>, window_params = [{transform_indices = @transform_0, window_bounds = array<i64: 1, 16, 4>}, {transform_indices = @transform_1, window_bounds = array<i64: 1, 16, 4>}, {transform_indices = @transform_2, window_bounds = array<i64: 1, 16, 4>}, {pipeline_mode = #tpu.pipeline_mode<synchronous>, transform_indices = @transform_3, window_bounds = array<i64: 4, 96>}, {pipeline_mode = #tpu.pipeline_mode<synchronous>, transform_indices = @transform_4, window_bounds = array<i64: 32, 32>}, {transform_indices = @transform_5, window_bounds = array<i64: 1, 16, 32>}]} {
    %c0 = arith.constant 0 : index
    %c0_0 = arith.constant 0 : index
    %c0_1 = arith.constant 0 : index
    %0 = vector.load %arg2[%c0, %c0_0, %c0_1] : memref<1x16x4xbf16, #tpu.memory_space<vmem>>, vector<1x16x4xbf16>
    %1 = vector.shape_cast %0 : vector<1x16x4xbf16> to vector<16x4xbf16>
    %c0_2 = arith.constant 0 : index
    %c0_3 = arith.constant 0 : index
    %c0_4 = arith.constant 0 : index
    %2 = vector.load %arg3[%c0_2, %c0_3, %c0_4] : memref<1x16x4xbf16, #tpu.memory_space<vmem>>, vector<1x16x4xbf16>
    %3 = vector.shape_cast %2 : vector<1x16x4xbf16> to vector<16x4xbf16>
    %c0_5 = arith.constant 0 : index
    %c0_6 = arith.constant 0 : index
    %c0_7 = arith.constant 0 : index
    %4 = vector.load %arg4[%c0_5, %c0_6, %c0_7] : memref<1x16x4xbf16, #tpu.memory_space<vmem>>, vector<1x16x4xbf16>
    %5 = vector.shape_cast %4 : vector<1x16x4xbf16> to vector<16x4xbf16>
    %c0_8 = arith.constant 0 : index
    %c0_9 = arith.constant 0 : index
    %6 = vector.load %arg5[%c0_8, %c0_9] : memref<4x96xbf16, #tpu.memory_space<vmem>>, vector<4x96xbf16>
    %c0_10 = arith.constant 0 : index
    %c0_11 = arith.constant 0 : index
    %7 = vector.load %arg6[%c0_10, %c0_11] : memref<32x32xbf16, #tpu.memory_space<vmem>>, vector<32x32xbf16>
    %8 = vector.extract_strided_slice %6 {offsets = [0, 0], sizes = [4, 32], strides = [1, 1]} : vector<4x96xbf16> to vector<4x32xbf16>
    %cst = arith.constant dense<0.000000e+00> : vector<16x32xf32>
    %9 = tpu.matmul %1, %8, %cst {dimension_numbers = #tpu.dot_dimension_numbers<[1], [0], [0], [1], [0, 0, 1, 1], [], []>} : vector<16x4xbf16>, vector<4x32xbf16>, vector<16x32xf32> -> vector<16x32xf32>
    %10 = vector.extract_strided_slice %6 {offsets = [0, 32], sizes = [4, 32], strides = [1, 1]} : vector<4x96xbf16> to vector<4x32xbf16>
    %cst_12 = arith.constant dense<0.000000e+00> : vector<16x32xf32>
    %11 = tpu.matmul %3, %10, %cst_12 {dimension_numbers = #tpu.dot_dimension_numbers<[1], [0], [0], [1], [0, 0, 1, 1], [], []>} : vector<16x4xbf16>, vector<4x32xbf16>, vector<16x32xf32> -> vector<16x32xf32>
    %12 = vector.extract_strided_slice %6 {offsets = [0, 64], sizes = [4, 32], strides = [1, 1]} : vector<4x96xbf16> to vector<4x32xbf16>
    %cst_13 = arith.constant dense<0.000000e+00> : vector<16x32xf32>
    %13 = tpu.matmul %5, %12, %cst_13 {dimension_numbers = #tpu.dot_dimension_numbers<[1], [0], [0], [1], [0, 0, 1, 1], [], []>} : vector<16x4xbf16>, vector<4x32xbf16>, vector<16x32xf32> -> vector<16x32xf32>
    %14 = arith.index_cast %arg0 : i32 to index
    %15 = memref.load %arg1[%14] : memref<2xi32, #tpu.memory_space<smem>>
    %16 = tpu.iota {dimensions = array<i32: 1>} : vector<16x16xi32>
    %17 = vector.broadcast %15 : i32 to vector<16x16xi32>
    %18 = arith.cmpi slt, %16, %17 : vector<16x16xi32>
    %19 = vector.extract_strided_slice %9 {offsets = [0, 0], sizes = [16, 8], strides = [1, 1]} : vector<16x32xf32> to vector<16x8xf32>
    %20 = arith.truncf %19 : vector<16x8xf32> to vector<16x8xbf16>
    %21 = vector.extract_strided_slice %11 {offsets = [0, 0], sizes = [16, 8], strides = [1, 1]} : vector<16x32xf32> to vector<16x8xf32>
    %22 = arith.truncf %21 : vector<16x8xf32> to vector<16x8xbf16>
    %23 = vector.extract_strided_slice %13 {offsets = [0, 0], sizes = [16, 8], strides = [1, 1]} : vector<16x32xf32> to vector<16x8xf32>
    %24 = arith.truncf %23 : vector<16x8xf32> to vector<16x8xbf16>
    %cst_14 = arith.constant dense<0.000000e+00> : vector<16x16xf32>
    %25 = tpu.matmul %20, %22, %cst_14 {dimension_numbers = #tpu.dot_dimension_numbers<[1], [1], [0], [0], [0, 0, 1, 0], [], []>} : vector<16x8xbf16>, vector<16x8xbf16>, vector<16x16xf32> -> vector<16x16xf32>
    %cst_15 = arith.constant 0.353553385 : f32
    %26 = vector.broadcast %cst_15 : f32 to vector<16x16xf32>
    %27 = arith.mulf %25, %26 : vector<16x16xf32>
    %cst_16 = arith.constant -1.000000e+06 : f32
    %28 = vector.broadcast %cst_16 : f32 to vector<16x16xf32>
    %29 = arith.select %18, %27, %28 : vector<16x16xi1>, vector<16x16xf32>
    %cst_17 = arith.constant dense<0xFF800000> : vector<16xf32>
    %30 = vector.multi_reduction <maximumf>, %29, %cst_17 [1] : vector<16x16xf32> to vector<16xf32>
    %31 = vector.shape_cast %30 : vector<16xf32> to vector<16x1xf32>
    %32 = vector.broadcast %31 : vector<16x1xf32> to vector<16x16xf32>
    %33 = arith.subf %29, %32 : vector<16x16xf32>
    %34 = math.exp %33 : vector<16x16xf32>
    %cst_18 = arith.constant dense<0.000000e+00> : vector<16xf32>
    %35 = vector.multi_reduction <add>, %34, %cst_18 [1] : vector<16x16xf32> to vector<16xf32>
    %36 = vector.shape_cast %35 : vector<16xf32> to vector<16x1xf32>
    %37 = tpu.reciprocal %36 {approx = true} : vector<16x1xf32> -> vector<16x1xf32>
    %38 = vector.broadcast %37 : vector<16x1xf32> to vector<16x16xf32>
    %39 = arith.mulf %34, %38 : vector<16x16xf32>
    %40 = arith.truncf %39 : vector<16x16xf32> to vector<16x16xbf16>
    %cst_19 = arith.constant dense<0.000000e+00> : vector<16x8xf32>
    %41 = tpu.matmul %40, %24, %cst_19 {dimension_numbers = #tpu.dot_dimension_numbers<[1], [0], [0], [1], [0, 0, 1, 1], [], []>} : vector<16x16xbf16>, vector<16x8xbf16>, vector<16x8xf32> -> vector<16x8xf32>
    %42 = vector.extract_strided_slice %9 {offsets = [0, 8], sizes = [16, 8], strides = [1, 1]} : vector<16x32xf32> to vector<16x8xf32>
    %43 = arith.truncf %42 : vector<16x8xf32> to vector<16x8xbf16>
    %44 = vector.extract_strided_slice %11 {offsets = [0, 8], sizes = [16, 8], strides = [1, 1]} : vector<16x32xf32> to vector<16x8xf32>
    %45 = arith.truncf %44 : vector<16x8xf32> to vector<16x8xbf16>
    %46 = vector.extract_strided_slice %13 {offsets = [0, 8], sizes = [16, 8], strides = [1, 1]} : vector<16x32xf32> to vector<16x8xf32>
    %47 = arith.truncf %46 : vector<16x8xf32> to vector<16x8xbf16>
    %cst_20 = arith.constant dense<0.000000e+00> : vector<16x16xf32>
    %48 = tpu.matmul %43, %45, %cst_20 {dimension_numbers = #tpu.dot_dimension_numbers<[1], [1], [0], [0], [0, 0, 1, 0], [], []>} : vector<16x8xbf16>, vector<16x8xbf16>, vector<16x16xf32> -> vector<16x16xf32>
    %cst_21 = arith.constant 0.353553385 : f32
    %49 = vector.broadcast %cst_21 : f32 to vector<16x16xf32>
    %50 = arith.mulf %48, %49 : vector<16x16xf32>
    %cst_22 = arith.constant -1.000000e+06 : f32
    %51 = vector.broadcast %cst_22 : f32 to vector<16x16xf32>
    %52 = arith.select %18, %50, %51 : vector<16x16xi1>, vector<16x16xf32>
    %cst_23 = arith.constant dense<0xFF800000> : vector<16xf32>
    %53 = vector.multi_reduction <maximumf>, %52, %cst_23 [1] : vector<16x16xf32> to vector<16xf32>
    %54 = vector.shape_cast %53 : vector<16xf32> to vector<16x1xf32>
    %55 = vector.broadcast %54 : vector<16x1xf32> to vector<16x16xf32>
    %56 = arith.subf %52, %55 : vector<16x16xf32>
    %57 = math.exp %56 : vector<16x16xf32>
    %cst_24 = arith.constant dense<0.000000e+00> : vector<16xf32>
    %58 = vector.multi_reduction <add>, %57, %cst_24 [1] : vector<16x16xf32> to vector<16xf32>
    %59 = vector.shape_cast %58 : vector<16xf32> to vector<16x1xf32>
    %60 = tpu.reciprocal %59 {approx = true} : vector<16x1xf32> -> vector<16x1xf32>
    %61 = vector.broadcast %60 : vector<16x1xf32> to vector<16x16xf32>
    %62 = arith.mulf %57, %61 : vector<16x16xf32>
    %63 = arith.truncf %62 : vector<16x16xf32> to vector<16x16xbf16>
    %cst_25 = arith.constant dense<0.000000e+00> : vector<16x8xf32>
    %64 = tpu.matmul %63, %47, %cst_25 {dimension_numbers = #tpu.dot_dimension_numbers<[1], [0], [0], [1], [0, 0, 1, 1], [], []>} : vector<16x16xbf16>, vector<16x8xbf16>, vector<16x8xf32> -> vector<16x8xf32>
    %65 = vector.extract_strided_slice %9 {offsets = [0, 16], sizes = [16, 8], strides = [1, 1]} : vector<16x32xf32> to vector<16x8xf32>
    %66 = arith.truncf %65 : vector<16x8xf32> to vector<16x8xbf16>
    %67 = vector.extract_strided_slice %11 {offsets = [0, 16], sizes = [16, 8], strides = [1, 1]} : vector<16x32xf32> to vector<16x8xf32>
    %68 = arith.truncf %67 : vector<16x8xf32> to vector<16x8xbf16>
    %69 = vector.extract_strided_slice %13 {offsets = [0, 16], sizes = [16, 8], strides = [1, 1]} : vector<16x32xf32> to vector<16x8xf32>
    %70 = arith.truncf %69 : vector<16x8xf32> to vector<16x8xbf16>
    %cst_26 = arith.constant dense<0.000000e+00> : vector<16x16xf32>
    %71 = tpu.matmul %66, %68, %cst_26 {dimension_numbers = #tpu.dot_dimension_numbers<[1], [1], [0], [0], [0, 0, 1, 0], [], []>} : vector<16x8xbf16>, vector<16x8xbf16>, vector<16x16xf32> -> vector<16x16xf32>
    %cst_27 = arith.constant 0.353553385 : f32
    %72 = vector.broadcast %cst_27 : f32 to vector<16x16xf32>
    %73 = arith.mulf %71, %72 : vector<16x16xf32>
    %cst_28 = arith.constant -1.000000e+06 : f32
    %74 = vector.broadcast %cst_28 : f32 to vector<16x16xf32>
    %75 = arith.select %18, %73, %74 : vector<16x16xi1>, vector<16x16xf32>
    %cst_29 = arith.constant dense<0xFF800000> : vector<16xf32>
    %76 = vector.multi_reduction <maximumf>, %75, %cst_29 [1] : vector<16x16xf32> to vector<16xf32>
    %77 = vector.shape_cast %76 : vector<16xf32> to vector<16x1xf32>
    %78 = vector.broadcast %77 : vector<16x1xf32> to vector<16x16xf32>
    %79 = arith.subf %75, %78 : vector<16x16xf32>
    %80 = math.exp %79 : vector<16x16xf32>
    %cst_30 = arith.constant dense<0.000000e+00> : vector<16xf32>
    %81 = vector.multi_reduction <add>, %80, %cst_30 [1] : vector<16x16xf32> to vector<16xf32>
    %82 = vector.shape_cast %81 : vector<16xf32> to vector<16x1xf32>
    %83 = tpu.reciprocal %82 {approx = true} : vector<16x1xf32> -> vector<16x1xf32>
    %84 = vector.broadcast %83 : vector<16x1xf32> to vector<16x16xf32>
    %85 = arith.mulf %80, %84 : vector<16x16xf32>
    %86 = arith.truncf %85 : vector<16x16xf32> to vector<16x16xbf16>
    %cst_31 = arith.constant dense<0.000000e+00> : vector<16x8xf32>
    %87 = tpu.matmul %86, %70, %cst_31 {dimension_numbers = #tpu.dot_dimension_numbers<[1], [0], [0], [1], [0, 0, 1, 1], [], []>} : vector<16x16xbf16>, vector<16x8xbf16>, vector<16x8xf32> -> vector<16x8xf32>
    %88 = vector.extract_strided_slice %9 {offsets = [0, 24], sizes = [16, 8], strides = [1, 1]} : vector<16x32xf32> to vector<16x8xf32>
    %89 = arith.truncf %88 : vector<16x8xf32> to vector<16x8xbf16>
    %90 = vector.extract_strided_slice %11 {offsets = [0, 24], sizes = [16, 8], strides = [1, 1]} : vector<16x32xf32> to vector<16x8xf32>
    %91 = arith.truncf %90 : vector<16x8xf32> to vector<16x8xbf16>
    %92 = vector.extract_strided_slice %13 {offsets = [0, 24], sizes = [16, 8], strides = [1, 1]} : vector<16x32xf32> to vector<16x8xf32>
    %93 = arith.truncf %92 : vector<16x8xf32> to vector<16x8xbf16>
    %cst_32 = arith.constant dense<0.000000e+00> : vector<16x16xf32>
    %94 = tpu.matmul %89, %91, %cst_32 {dimension_numbers = #tpu.dot_dimension_numbers<[1], [1], [0], [0], [0, 0, 1, 0], [], []>} : vector<16x8xbf16>, vector<16x8xbf16>, vector<16x16xf32> -> vector<16x16xf32>
    %cst_33 = arith.constant 0.353553385 : f32
    %95 = vector.broadcast %cst_33 : f32 to vector<16x16xf32>
    %96 = arith.mulf %94, %95 : vector<16x16xf32>
    %cst_34 = arith.constant -1.000000e+06 : f32
    %97 = vector.broadcast %cst_34 : f32 to vector<16x16xf32>
    %98 = arith.select %18, %96, %97 : vector<16x16xi1>, vector<16x16xf32>
    %cst_35 = arith.constant dense<0xFF800000> : vector<16xf32>
    %99 = vector.multi_reduction <maximumf>, %98, %cst_35 [1] : vector<16x16xf32> to vector<16xf32>
    %100 = vector.shape_cast %99 : vector<16xf32> to vector<16x1xf32>
    %101 = vector.broadcast %100 : vector<16x1xf32> to vector<16x16xf32>
    %102 = arith.subf %98, %101 : vector<16x16xf32>
    %103 = math.exp %102 : vector<16x16xf32>
    %cst_36 = arith.constant dense<0.000000e+00> : vector<16xf32>
    %104 = vector.multi_reduction <add>, %103, %cst_36 [1] : vector<16x16xf32> to vector<16xf32>
    %105 = vector.shape_cast %104 : vector<16xf32> to vector<16x1xf32>
    %106 = tpu.reciprocal %105 {approx = true} : vector<16x1xf32> -> vector<16x1xf32>
    %107 = vector.broadcast %106 : vector<16x1xf32> to vector<16x16xf32>
    %108 = arith.mulf %103, %107 : vector<16x16xf32>
    %109 = arith.truncf %108 : vector<16x16xf32> to vector<16x16xbf16>
    %cst_37 = arith.constant dense<0.000000e+00> : vector<16x8xf32>
    %110 = tpu.matmul %109, %93, %cst_37 {dimension_numbers = #tpu.dot_dimension_numbers<[1], [0], [0], [1], [0, 0, 1, 1], [], []>} : vector<16x16xbf16>, vector<16x8xbf16>, vector<16x8xf32> -> vector<16x8xf32>
    %111 = tpu.concatenate %41, %64, %87, %110 in 1 : vector<16x8xf32>, vector<16x8xf32>, vector<16x8xf32>, vector<16x8xf32> -> vector<16x32xf32>
    %112 = arith.truncf %111 : vector<16x32xf32> to vector<16x32xbf16>
    %cst_38 = arith.constant dense<0.000000e+00> : vector<16x32xf32>
    %113 = tpu.matmul %112, %7, %cst_38 {dimension_numbers = #tpu.dot_dimension_numbers<[1], [0], [0], [1], [0, 0, 1, 1], [], []>} : vector<16x32xbf16>, vector<32x32xbf16>, vector<16x32xf32> -> vector<16x32xf32>
    %c0_39 = arith.constant 0 : index
    %c0_40 = arith.constant 0 : index
    %c0_41 = arith.constant 0 : index
    %114 = vector.load %arg7[%c0_39, %c0_40, %c0_41] : memref<1x16x32xf32, #tpu.memory_space<vmem>>, vector<1x16x32xf32>
    %115 = vector.shape_cast %114 : vector<1x16x32xf32> to vector<16x32xf32>
    %116 = vector.shape_cast %113 : vector<16x32xf32> to vector<1x16x32xf32>
    tpu.vector_store %arg7[%c0_39, %c0_40, %c0_41], %116 {strides = array<i32>} : memref<1x16x32xf32, #tpu.memory_space<vmem>>, vector<1x16x32xf32>,
    return
  }
  func.func @transform_0(%arg0: i32, %arg1: memref<2xi32, #tpu.memory_space<smem>>) -> (i32, i32, i32) {
    %c0_i32 = arith.constant 0 : i32
    %c0_i32_0 = arith.constant 0 : i32
    %c0_i32_1 = arith.constant 0 : i32
    return %arg0, %c0_i32, %c0_i32_0 : i32, i32, i32
  }
  func.func @transform_1(%arg0: i32, %arg1: memref<2xi32, #tpu.memory_space<smem>>) -> (i32, i32, i32) {
    %c0_i32 = arith.constant 0 : i32
    %c0_i32_0 = arith.constant 0 : i32
    %c0_i32_1 = arith.constant 0 : i32
    return %arg0, %c0_i32, %c0_i32_0 : i32, i32, i32
  }
  func.func @transform_2(%arg0: i32, %arg1: memref<2xi32, #tpu.memory_space<smem>>) -> (i32, i32, i32) {
    %c0_i32 = arith.constant 0 : i32
    %c0_i32_0 = arith.constant 0 : i32
    %c0_i32_1 = arith.constant 0 : i32
    return %arg0, %c0_i32, %c0_i32_0 : i32, i32, i32
  }
  func.func @transform_3(%arg0: i32, %arg1: memref<2xi32, #tpu.memory_space<smem>>) -> (i32, i32) {
    %c0_i32 = arith.constant 0 : i32
    %c0_i32_0 = arith.constant 0 : i32
    %c0_i32_1 = arith.constant 0 : i32
    return %c0_i32, %c0_i32_0 : i32, i32
  }
  func.func @transform_4(%arg0: i32, %arg1: memref<2xi32, #tpu.memory_space<smem>>) -> (i32, i32) {
    %c0_i32 = arith.constant 0 : i32
    %c0_i32_0 = arith.constant 0 : i32
    %c0_i32_1 = arith.constant 0 : i32
    return %c0_i32, %c0_i32_0 : i32, i32
  }
  func.func @transform_5(%arg0: i32, %arg1: memref<2xi32, #tpu.memory_space<smem>>) -> (i32, i32, i32) {
    %c0_i32 = arith.constant 0 : i32
    %c0_i32_0 = arith.constant 0 : i32
    %c0_i32_1 = arith.constant 0 : i32
    return %arg0, %c0_i32, %c0_i32_0 : i32, i32, i32
  }
}

</mosaic_0001>

<llo_original>
// kernel: multi_head_attention_forward.1
$region0: #{multi_head_attention_forward.1}
  #allocation0 [shape = 'u32[]', space=smem, size = 0x4, offset = 0x4, fixed_abs, tag = 'smem constant byte address 0x4 - core index']
  #allocation1 [shape = 'u32[144,128]{1,0:T(1,128)}', space=vmem, size = 0x12000, scoped, tag = 'internal scratch']
  #allocation2 [shape = 's32[1]{0}', space=sflag, size = 0x4, scoped, tag = 'scoped memory for multi_head_attention_forward.1']
  #allocation3 [shape = 'u8[512]{0}', space=smem, size = 0x200, scoped, tag = 'prefetched SMEM operand 0']
  %s0 = inlined_call_operand.vmem [shape: s32[2], index: 0, kind: input, shape index: {}]
  %s1 = inlined_call_operand.vmem [shape: bf16[2,16,4], index: 1, kind: input, shape index: {}]
  %s2 = inlined_call_operand.vmem [shape: bf16[2,16,4], index: 2, kind: input, shape index: {}]
  %s3 = inlined_call_operand.vmem [shape: bf16[2,16,4], index: 3, kind: input, shape index: {}]
  %s4 = inlined_call_operand.vmem [shape: bf16[4,96], index: 4, kind: input, shape index: {}]
  %s5 = inlined_call_operand.vmem [shape: bf16[32,32], index: 5, kind: input, shape index: {}]
  %s6 = inlined_call_operand.hbm [shape: f32[2,16,32], index: 6, kind: output, shape index: {}]
  %s7 = sld [smem:[#allocation0]]
  $region53: #{multi_head_attention_forward.1} parent=0
    _
  %s9 = ssub.s32 1, %s7
  %s10 = scalar_select 0, %s9, %s7
  %s11 = sshll.u32 %s0, 4
  %s12 = int_to_ptr.vmem [resolvable:$true] %s11
  %14 = dma.vmem_to_smem %s12, 16, [#allocation3], [#allocation2]
  %15 = dma.done [#allocation2], 16
  %16 = sfence
  $region1: #{multi_head_attention_forward.1} parent=0
    #allocation4 [shape = 'u8[16384]{0}', space=vmem, size = 0x4000, scoped, tag = 'output window, operand 0']
    #allocation5 [shape = 's32[2]{0}', space=sflag, size = 0x8, scoped, tag = 'scoped memory for multi_head_attention_forward.1']
    %17 = vsyncpa [#allocation5], 0
    %s18 = scalar_lea.sflag [#allocation5], 1
    %19 = vsyncpa %s18, 0
    loop: start=0, step=1, limit=4
    $region2: #{multi_head_attention_forward.1} parent=1 // loop_pre_header
      _
    $region3: #{multi_head_attention_forward.1} parent=1 // loop_header
      %s21 = sphi 0, %s25
      %p22 = scmp.ge.s32.totalorder %s21, 4
      %s31 = sphi 0, %s33
      %s34 = sphi 0, %s31
      %s35 = sphi 0, %s34
      %s51 = sphi 0, %s35
      %s57 = sphi 0, %s59
      %s60 = sphi 0, %s57
      %s61 = sphi 0, %s60
      %s77 = sphi 0, %s61
      %s83 = sphi 0, %s85
      %s86 = sphi 0, %s83
      %s87 = sphi 0, %s86
      %s103 = sphi 0, %s87
      %s107 = sphi 0, %s107
      %s109 = sphi 0, %s107
      %s110 = sphi 0, %s109
      %s124 = sphi 0, %s110
      %s128 = sphi 0, %s128
      %s130 = sphi 0, %s128
      %s131 = sphi 0, %s130
      %s145 = sphi 0, %s131
      %s151 = sphi 0, %s153
      %s154 = sphi 0, %s151
      %s155 = sphi 0, %s154
      %s171 = sphi 0, %s155
    $region4: #{multi_head_attention_forward.1} parent=1 // loop_header_branch
      %24 = sbr.rel (%p22) target = $region8
    $region5: #{multi_head_attention_forward.1} parent=1 // loop_body
      %s26 = ssub.s32 %s21, 1
      %s27 = ssub.s32 %s21, 2
      %s28 = sadd.s32 %s21, 1
      %s29 = ssub.s32 %s21, %s28
      %p30 = scmp.eq.s32.totalorder %s29, 0
      %s32 = sadd.s32 %s31, 1
      %s33 = scalar_select %p30, %s31, %s32
      %p36 = pneg %p30
      %p37 = scmp.eq.s32.totalorder %s21, 1
      %p38 = por %p36, %p37
      %p39 = scmp.ne.s32.totalorder %s31, %s34
      %p40 = scmp.eq.s32.totalorder %s21, 0
      %p41 = por %p39, %p40
      %p42 = scmp.ne.s32.totalorder %s31, %s34
      %p43 = scmp.eq.s32.totalorder %s26, 1
      %p44 = por %p42, %p43
      %p45 = scmp.ne.s32.totalorder %s34, %s35
      %p46 = scmp.eq.s32.totalorder %s26, 0
      %p47 = por %p45, %p46
      %p48 = scmp.ne.s32.totalorder %s34, %s35
      %p49 = scmp.eq.s32.totalorder %s27, 1
      %p50 = por %p48, %p49
      %p52 = scmp.ne.s32.totalorder %s35, %s51
      %p53 = scmp.eq.s32.totalorder %s27, 0
      %p54 = por %p52, %p53
      %s55 = ssub.s32 %s21, %s28
      %p56 = scmp.eq.s32.totalorder %s55, 0
      %s58 = sadd.s32 %s57, 1
      %s59 = scalar_select %p56, %s57, %s58
      %p62 = pneg %p56
      %p63 = scmp.eq.s32.totalorder %s21, 1
      %p64 = por %p62, %p63
      %p65 = scmp.ne.s32.totalorder %s57, %s60
      %p66 = scmp.eq.s32.totalorder %s21, 0
      %p67 = por %p65, %p66
      %p68 = scmp.ne.s32.totalorder %s57, %s60
      %p69 = scmp.eq.s32.totalorder %s26, 1
      %p70 = por %p68, %p69
      %p71 = scmp.ne.s32.totalorder %s60, %s61
      %p72 = scmp.eq.s32.totalorder %s26, 0
      %p73 = por %p71, %p72
      %p74 = scmp.ne.s32.totalorder %s60, %s61
      %p75 = scmp.eq.s32.totalorder %s27, 1
      %p76 = por %p74, %p75
      %p78 = scmp.ne.s32.totalorder %s61, %s77
      %p79 = scmp.eq.s32.totalorder %s27, 0
      %p80 = por %p78, %p79
      %s81 = ssub.s32 %s21, %s28
      %p82 = scmp.eq.s32.totalorder %s81, 0
      %s84 = sadd.s32 %s83, 1
      %s85 = scalar_select %p82, %s83, %s84
      %p88 = pneg %p82
      %p89 = scmp.eq.s32.totalorder %s21, 1
      %p90 = por %p88, %p89
      %p91 = scmp.ne.s32.totalorder %s83, %s86
      %p92 = scmp.eq.s32.totalorder %s21, 0
      %p93 = por %p91, %p92
      %p94 = scmp.ne.s32.totalorder %s83, %s86
      %p95 = scmp.eq.s32.totalorder %s26, 1
      %p96 = por %p94, %p95
      %p97 = scmp.ne.s32.totalorder %s86, %s87
      %p98 = scmp.eq.s32.totalorder %s26, 0
      %p99 = por %p97, %p98
      %p100 = scmp.ne.s32.totalorder %s86, %s87
      %p101 = scmp.eq.s32.totalorder %s27, 1
      %p102 = por %p100, %p101
      %p104 = scmp.ne.s32.totalorder %s87, %s103
      %p105 = scmp.eq.s32.totalorder %s27, 0
      %p106 = por %p104, %p105
      %s108 = sadd.s32 %s107, 1
      %p111 = scmp.eq.s32.totalorder %s21, 1
      %p112 = scmp.ne.s32.totalorder %s107, %s109
      %p113 = scmp.eq.s32.totalorder %s21, 0
      %p114 = por %p112, %p113
      %p115 = scmp.ne.s32.totalorder %s107, %s109
      %p116 = scmp.eq.s32.totalorder %s26, 1
      %p117 = por %p115, %p116
      %p118 = scmp.ne.s32.totalorder %s109, %s110
      %p119 = scmp.eq.s32.totalorder %s26, 0
      %p120 = por %p118, %p119
      %p121 = scmp.ne.s32.totalorder %s109, %s110
      %p122 = scmp.eq.s32.totalorder %s27, 1
      %p123 = por %p121, %p122
      %p125 = scmp.ne.s32.totalorder %s110, %s124
      %p126 = scmp.eq.s32.totalorder %s27, 0
      %p127 = por %p125, %p126
      %s129 = sadd.s32 %s128, 1
      %p132 = scmp.eq.s32.totalorder %s21, 1
      %p133 = scmp.ne.s32.totalorder %s128, %s130
      %p134 = scmp.eq.s32.totalorder %s21, 0
      %p135 = por %p133, %p134
      %p136 = scmp.ne.s32.totalorder %s128, %s130
      %p137 = scmp.eq.s32.totalorder %s26, 1
      %p138 = por %p136, %p137
      %p139 = scmp.ne.s32.totalorder %s130, %s131
      %p140 = scmp.eq.s32.totalorder %s26, 0
      %p141 = por %p139, %p140
      %p142 = scmp.ne.s32.totalorder %s130, %s131
      %p143 = scmp.eq.s32.totalorder %s27, 1
      %p144 = por %p142, %p143
      %p146 = scmp.ne.s32.totalorder %s131, %s145
      %p147 = scmp.eq.s32.totalorder %s27, 0
      %p148 = por %p146, %p147
      %s149 = ssub.s32 %s21, %s28
      %p150 = scmp.eq.s32.totalorder %s149, 0
      %s152 = sadd.s32 %s151, 1
      %s153 = scalar_select %p150, %s151, %s152
      %p156 = pneg %p150
      %p157 = scmp.eq.s32.totalorder %s21, 1
      %p158 = por %p156, %p157
      %p159 = scmp.ne.s32.totalorder %s151, %s154
      %p160 = scmp.eq.s32.totalorder %s21, 0
      %p161 = por %p159, %p160
      %p162 = scmp.ne.s32.totalorder %s151, %s154
      %p163 = scmp.eq.s32.totalorder %s26, 1
      %p164 = por %p162, %p163
      %p165 = scmp.ne.s32.totalorder %s154, %s155
      %p166 = scmp.eq.s32.totalorder %s26, 0
      %p167 = por %p165, %p166
      %p168 = scmp.ne.s32.totalorder %s154, %s155
      %p169 = scmp.eq.s32.totalorder %s27, 1
      %p170 = por %p168, %p169
      %p172 = scmp.ne.s32.totalorder %s155, %s171
      %p173 = scmp.eq.s32.totalorder %s27, 0
      %p174 = por %p172, %p173
      %p175 = scmp.le.s32.totalorder 1, %s21
      %p176 = scmp.lt.s32.totalorder %s21, 3
      %p177 = pnand %p175, %p176
      %p178 = pneg %p177
      // Predicated region
      $region9: #{multi_head_attention_forward.1} parent=5 // pred_check
        _
      $region10: #{multi_head_attention_forward.1} parent=5 // pred_check_branch
        %180 = sbr.rel (%p177) target = $region12
      $region11: #{multi_head_attention_forward.1} parent=5 // pred_region
        %s181 = ssub.s32 %s21, 1
        // Predicated region
        $region13: #{multi_head_attention_forward.1} parent=11 // pred_check
          %p182 = pneg %p120
        $region14: #{multi_head_attention_forward.1} parent=11 // pred_check_branch
          %184 = sbr.rel (%p182) target = $region16
        $region15: #{multi_head_attention_forward.1} parent=11 // pred_region
          _
        $region16: #{multi_head_attention_forward.1} parent=11 // pred_fallthru
          _
        // Predicated region
        $region17: #{multi_head_attention_forward.1} parent=11 // pred_check
          %p185 = pneg %p141
        $region18: #{multi_head_attention_forward.1} parent=11 // pred_check_branch
          %187 = sbr.rel (%p185) target = $region20
        $region19: #{multi_head_attention_forward.1} parent=11 // pred_region
          _
        $region20: #{multi_head_attention_forward.1} parent=11 // pred_fallthru
          _
      $region12: #{multi_head_attention_forward.1} parent=5 // pred_fallthru
        _
      %p188 = scmp.lt.s32.totalorder %s21, 2
      // Predicated region
      $region21: #{multi_head_attention_forward.1} parent=5 // pred_check
        %p189 = pneg %p188
      $region22: #{multi_head_attention_forward.1} parent=5 // pred_check_branch
        %191 = sbr.rel (%p189) target = $region24
      $region23: #{multi_head_attention_forward.1} parent=5 // pred_region
        // Predicated region
        $region25: #{multi_head_attention_forward.1} parent=23 // pred_check
          %p192 = pneg %p41
        $region26: #{multi_head_attention_forward.1} parent=23 // pred_check_branch
          %194 = sbr.rel (%p192) target = $region28
        $region27: #{multi_head_attention_forward.1} parent=23 // pred_region
          %p195 = scmp.lt.s32.totalorder %s21, 1
          %s196 = scalar_select %p195, %s21, 1
          %s197 = smul.addr %s196, 2
          %s198 = smul.addr %s197, 4
          %s199 = scalar_lea.vmem %s1, %s198
        $region28: #{multi_head_attention_forward.1} parent=23 // pred_fallthru
          _
        // Predicated region
        $region29: #{multi_head_attention_forward.1} parent=23 // pred_check
          %p200 = pneg %p67
        $region30: #{multi_head_attention_forward.1} parent=23 // pred_check_branch
          %202 = sbr.rel (%p200) target = $region32
        $region31: #{multi_head_attention_forward.1} parent=23 // pred_region
          %p203 = scmp.lt.s32.totalorder %s21, 1
          %s204 = scalar_select %p203, %s21, 1
          %s205 = smul.addr %s204, 2
          %s206 = smul.addr %s205, 4
          %s207 = scalar_lea.vmem %s2, %s206
        $region32: #{multi_head_attention_forward.1} parent=23 // pred_fallthru
          _
        // Predicated region
        $region33: #{multi_head_attention_forward.1} parent=23 // pred_check
          %p208 = pneg %p93
        $region34: #{multi_head_attention_forward.1} parent=23 // pred_check_branch
          %210 = sbr.rel (%p208) target = $region36
        $region35: #{multi_head_attention_forward.1} parent=23 // pred_region
          %p211 = scmp.lt.s32.totalorder %s21, 1
          %s212 = scalar_select %p211, %s21, 1
          %s213 = smul.addr %s212, 2
          %s214 = smul.addr %s213, 4
          %s215 = scalar_lea.vmem %s3, %s214
        $region36: #{multi_head_attention_forward.1} parent=23 // pred_fallthru
          _
      $region24: #{multi_head_attention_forward.1} parent=5 // pred_fallthru
        _
      %p216 = scmp.le.s32.totalorder 1, %s21
      %p217 = scmp.lt.s32.totalorder %s21, 3
      %p218 = pnand %p216, %p217
      %p219 = pneg %p218
      // Predicated region
      $region37: #{multi_head_attention_forward.1} parent=5 // pred_check
        _
      $region38: #{multi_head_attention_forward.1} parent=5 // pred_check_branch
        %221 = sbr.rel (%p218) target = $region40
      $region39: #{multi_head_attention_forward.1} parent=5 // pred_region
        %s222 = ssub.s32 %s21, 1
        %p223 = scmp.lt.s32.totalorder %s26, 1
        %s224 = scalar_select %p223, %s26, 1
        %s225 = smul.addr %s224, 2
        %s226 = smul.addr %s225, 4
        %s227 = scalar_lea.vmem %s1, %s226
        %p228 = pneg %p47
        %p229 = pneg %p44
        %p230 = scmp.lt.s32.totalorder %s26, 1
        %s231 = scalar_select %p230, %s26, 1
        %s232 = smul.addr %s231, 2
        %s233 = smul.addr %s232, 4
        %s234 = scalar_lea.vmem %s2, %s233
        %p235 = pneg %p73
        %p236 = pneg %p70
        %p237 = scmp.lt.s32.totalorder %s26, 1
        %s238 = scalar_select %p237, %s26, 1
        %s239 = smul.addr %s238, 2
        %s240 = smul.addr %s239, 4
        %s241 = scalar_lea.vmem %s3, %s240
        %p242 = pneg %p99
        %p243 = pneg %p96
        %p244 = pneg %p120
        %p245 = pneg %p117
        %p246 = pneg %p141
        %p247 = pneg %p138
        %p248 = pneg %p167
        %p249 = pneg %p164
        %s250 = sand.u32 %s154, 1
        %s251 = scalar_lea.sflag [#allocation5], %s250
        %s252 = sand.u32 %s154, 1
        %s253 = smul.addr %s252, 16
        %s254 = scalar_lea.vmem [#allocation4], %s253
        %p255 = scmp.lt.s32.totalorder %s26, 1
        %s256 = scalar_select %p255, %s26, 1
        %s257 = smul.addr %s256, 2
        %s258 = smul.addr %s257, 4
        %s259 = scalar_lea.vmem %s1, %s258
        %p260 = scmp.lt.s32.totalorder %s26, 1
        %s261 = scalar_select %p260, %s26, 1
        %s262 = smul.addr %s261, 2
        %s263 = smul.addr %s262, 4
        %s264 = scalar_lea.vmem %s2, %s263
        %p265 = scmp.lt.s32.totalorder %s26, 1
        %s266 = scalar_select %p265, %s26, 1
        %s267 = smul.addr %s266, 2
        %s268 = smul.addr %s267, 4
        %s269 = scalar_lea.vmem %s3, %s268
        %v271 = vld [vmem:[%s259] sm:$0xf]
        %v272 = vld [vmem:[%s259 + $0x4] sm:$0xf]
        %v273 = vld [vmem:[%s264] sm:$0xf]
        %v274 = vld [vmem:[%s264 + $0x4] sm:$0xf]
        %v275 = vld [vmem:[%s269] sm:$0xf]
        %v276 = vld [vmem:[%s269 + $0x4] sm:$0xf]
        %v277 = vld [vmem:[%s4] sm:$0x3]
        %v278 = vld [vmem:[%s5] sm:$0xf]
        %v279 = vld [vmem:[%s5 + $0x4] sm:$0xf]
        %v280 = vld [vmem:[%s5 + $0x8] sm:$0xf]
        %v281 = vld [vmem:[%s5 + $0xc] sm:$0xf]
        %v284 = vunpack.c.l.b16 %v271
        %v285 = vunpack.c.l.b16 %v272
        %v286 = vpack.c.b16 %v285, %v284
        %vm287 = vcmask 31744
        %v289 = vsel %vm287, %v286, 0
        %vm291 = vcmask 1041408
        %v293 = vsel %vm291, %v277, 0
        %295 = vmatprep.subr.bf16.mxu0 0
        %296 = vmatpush1.bf16.msra.mxu0 %v293
        %297 = vmatprep.subr.bf16.mxu0 0
        %298 = vmatpush1.bf16.msra.mxu0 0
        %299 = vmatprep.subr.bf16.mxu0 0
        %300 = vmatpush1.bf16.msra.mxu0 0
        %301 = vmatprep.subr.bf16.mxu0 0
        %302 = vmatpush1.bf16.msra.mxu0 0
        %303 = vmatprep.subr.bf16.mxu0 0
        %304 = vmatpush1.bf16.msra.mxu0 0
        %305 = vmatprep.subr.bf16.mxu0 0
        %306 = vmatpush1.bf16.msra.mxu0 0
        %307 = vmatprep.subr.bf16.mxu0 0
        %308 = vmatpush1.bf16.msra.mxu0 0
        %309 = vmatprep.subr.bf16.mxu0 0
        %310 = vmatpush1.bf16.msra.mxu0 0
        %311 = vmatprep.subr.bf16.mxu0 0
        %312 = vmatpush1.bf16.msra.mxu0 0
        %313 = vmatprep.subr.bf16.mxu0 0
        %314 = vmatpush1.bf16.msra.mxu0 0
        %315 = vmatprep.subr.bf16.mxu0 0
        %316 = vmatpush1.bf16.msra.mxu0 0
        %317 = vmatprep.subr.bf16.mxu0 0
        %318 = vmatpush1.bf16.msra.mxu0 0
        %319 = vmatprep.subr.bf16.mxu0 0
        %320 = vmatpush1.bf16.msra.mxu0 0
        %321 = vmatprep.subr.bf16.mxu0 0
        %322 = vmatpush1.bf16.msra.mxu0 0
        %323 = vmatprep.subr.bf16.mxu0 0
        %324 = vmatpush1.bf16.msra.mxu0 0
        %325 = vmatprep.subr.bf16.mxu0 0
        %326 = vmatpush1.bf16.msra.mxu0 0
        %327 = vmatprep.mubr.bf16.mxu0 0
        %328 = vmatmul.mubr.bf16.gmra.mrb[0].mxu0 %v289
        %v329 = vpop.f32.mrb[0].mxu0
        %v330 = vadd.f32 0.0, %v329
        %v331 = vpop.f32.mrb[0].mxu0
        %v332 = vpop.f32.mrb[0].mxu0
        %v333 = vadd.f32 0.0, %v332
        %v334 = vpop.f32.mrb[0].mxu0
        %335 = vdwg.mxu0
        %v338 = vunpack.c.l.b16 %v273
        %v339 = vunpack.c.l.b16 %v274
        %v340 = vpack.c.b16 %v339, %v338
        %v343 = vunpack.c.l.s4 1983009808
        %v344 = vunpack.c.0.s8 %v343
        %v345 = vlaneseq
        %v346 = vshrl.u32 %v345, 7
        %v347 = vsub.s32 %v344, %v346
        %v348 = vrot.slane %v277, %v347
        %349 = vrot.lane.b32.xlu0 %v348, 96
        %v350 = vpop.permute.xlu0 %349
        %v352 = vsel %vm287, %v340, 0
        %v355 = vsel %vm291, %v350, 0
        %357 = vmatprep.subr.bf16.mxu0 0
        %358 = vmatpush1.bf16.msra.mxu0 %v355
        %359 = vmatprep.subr.bf16.mxu0 0
        %360 = vmatpush1.bf16.msra.mxu0 0
        %361 = vmatprep.subr.bf16.mxu0 0
        %362 = vmatpush1.bf16.msra.mxu0 0
        %363 = vmatprep.subr.bf16.mxu0 0
        %364 = vmatpush1.bf16.msra.mxu0 0
        %365 = vmatprep.subr.bf16.mxu0 0
        %366 = vmatpush1.bf16.msra.mxu0 0
        %367 = vmatprep.subr.bf16.mxu0 0
        %368 = vmatpush1.bf16.msra.mxu0 0
        %369 = vmatprep.subr.bf16.mxu0 0
        %370 = vmatpush1.bf16.msra.mxu0 0
        %371 = vmatprep.subr.bf16.mxu0 0
        %372 = vmatpush1.bf16.msra.mxu0 0
        %373 = vmatprep.subr.bf16.mxu0 0
        %374 = vmatpush1.bf16.msra.mxu0 0
        %375 = vmatprep.subr.bf16.mxu0 0
        %376 = vmatpush1.bf16.msra.mxu0 0
        %377 = vmatprep.subr.bf16.mxu0 0
        %378 = vmatpush1.bf16.msra.mxu0 0
        %379 = vmatprep.subr.bf16.mxu0 0
        %380 = vmatpush1.bf16.msra.mxu0 0
        %381 = vmatprep.subr.bf16.mxu0 0
        %382 = vmatpush1.bf16.msra.mxu0 0
        %383 = vmatprep.subr.bf16.mxu0 0
        %384 = vmatpush1.bf16.msra.mxu0 0
        %385 = vmatprep.subr.bf16.mxu0 0
        %386 = vmatpush1.bf16.msra.mxu0 0
        %387 = vmatprep.subr.bf16.mxu0 0
        %388 = vmatpush1.bf16.msra.mxu0 0
        %389 = vmatprep.mubr.bf16.mxu0 0
        %390 = vmatmul.mubr.bf16.gmra.mrb[0].mxu0 %v352
        %v391 = vpop.f32.mrb[0].mxu0
        %v392 = vadd.f32 0.0, %v391
        %v393 = vpop.f32.mrb[0].mxu0
        %v394 = vpop.f32.mrb[0].mxu0
        %v395 = vadd.f32 0.0, %v394
        %v396 = vpop.f32.mrb[0].mxu0
        %397 = vdwg.mxu0
        %v400 = vunpack.c.l.b16 %v275
        %v401 = vunpack.c.l.b16 %v276
        %v402 = vpack.c.b16 %v401, %v400
        %403 = vrot.lane.b32.xlu0 %v348, 64
        %v404 = vpop.permute.xlu0 %403
        %v406 = vsel %vm287, %v402, 0
        %v409 = vsel %vm291, %v404, 0
        %411 = vmatprep.subr.bf16.mxu0 0
        %412 = vmatpush1.bf16.msra.mxu0 %v409
        %413 = vmatprep.subr.bf16.mxu0 0
        %414 = vmatpush1.bf16.msra.mxu0 0
        %415 = vmatprep.subr.bf16.mxu0 0
        %416 = vmatpush1.bf16.msra.mxu0 0
        %417 = vmatprep.subr.bf16.mxu0 0
        %418 = vmatpush1.bf16.msra.mxu0 0
        %419 = vmatprep.subr.bf16.mxu0 0
        %420 = vmatpush1.bf16.msra.mxu0 0
        %421 = vmatprep.subr.bf16.mxu0 0
        %422 = vmatpush1.bf16.msra.mxu0 0
        %423 = vmatprep.subr.bf16.mxu0 0
        %424 = vmatpush1.bf16.msra.mxu0 0
        %425 = vmatprep.subr.bf16.mxu0 0
        %426 = vmatpush1.bf16.msra.mxu0 0
        %427 = vmatprep.subr.bf16.mxu0 0
        %428 = vmatpush1.bf16.msra.mxu0 0
        %429 = vmatprep.subr.bf16.mxu0 0
        %430 = vmatpush1.bf16.msra.mxu0 0
        %431 = vmatprep.subr.bf16.mxu0 0
        %432 = vmatpush1.bf16.msra.mxu0 0
        %433 = vmatprep.subr.bf16.mxu0 0
        %434 = vmatpush1.bf16.msra.mxu0 0
        %435 = vmatprep.subr.bf16.mxu0 0
        %436 = vmatpush1.bf16.msra.mxu0 0
        %437 = vmatprep.subr.bf16.mxu0 0
        %438 = vmatpush1.bf16.msra.mxu0 0
        %439 = vmatprep.subr.bf16.mxu0 0
        %440 = vmatpush1.bf16.msra.mxu0 0
        %441 = vmatprep.subr.bf16.mxu0 0
        %442 = vmatpush1.bf16.msra.mxu0 0
        %443 = vmatprep.mubr.bf16.mxu0 0
        %444 = vmatmul.mubr.bf16.gmra.mrb[0].mxu0 %v406
        %v445 = vpop.f32.mrb[0].mxu0
        %v446 = vadd.f32 0.0, %v445
        %v447 = vpop.f32.mrb[0].mxu0
        %v448 = vpop.f32.mrb[0].mxu0
        %v449 = vadd.f32 0.0, %v448
        %v450 = vpop.f32.mrb[0].mxu0
        %451 = vdwg.mxu0
        %s452 = sld [smem:[#allocation3 + %s26]]
        %v453 = vlaneseq
        %v454 = vand.u32 %v453, 127
        %v455 = vstv %s452
        %vm456 = vcmp.lt.s32.totalorder %v454, %v455
        %v457 = vpack.c.bf16 %v333, %v330
        %v458 = vpack.c.bf16 %v395, %v392
        %v459 = vpack.c.bf16 %v449, %v446
        %vm460 = vcmask 64512
        %v462 = vsel %vm460, %v457, 0
        %v465 = vsel %vm460, %v458, 0
        %467 = vmatprep.subr.bf16.mxu0 0
        %468 = vmatpush1.bf16.xpose.msra.mxu0 %v465
        %469 = vmatprep.subr.bf16.mxu0 0
        %470 = vmatpush1.bf16.xpose.msra.mxu0 0
        %471 = vmatprep.subr.bf16.mxu0 0
        %472 = vmatpush1.bf16.xpose.msra.mxu0 0
        %473 = vmatprep.subr.bf16.mxu0 0
        %474 = vmatpush1.bf16.xpose.msra.mxu0 0
        %475 = vmatprep.subr.bf16.mxu0 0
        %476 = vmatpush1.bf16.xpose.msra.mxu0 0
        %477 = vmatprep.subr.bf16.mxu0 0
        %478 = vmatpush1.bf16.xpose.msra.mxu0 0
        %479 = vmatprep.subr.bf16.mxu0 0
        %480 = vmatpush1.bf16.xpose.msra.mxu0 0
        %481 = vmatprep.subr.bf16.mxu0 0
        %482 = vmatpush1.bf16.xpose.msra.mxu0 0
        %483 = vmatprep.subr.bf16.mxu0 0
        %484 = vmatpush1.bf16.xpose.msra.mxu0 0
        %485 = vmatprep.subr.bf16.mxu0 0
        %486 = vmatpush1.bf16.xpose.msra.mxu0 0
        %487 = vmatprep.subr.bf16.mxu0 0
        %488 = vmatpush1.bf16.xpose.msra.mxu0 0
        %489 = vmatprep.subr.bf16.mxu0 0
        %490 = vmatpush1.bf16.xpose.msra.mxu0 0
        %491 = vmatprep.subr.bf16.mxu0 0
        %492 = vmatpush1.bf16.xpose.msra.mxu0 0
        %493 = vmatprep.subr.bf16.mxu0 0
        %494 = vmatpush1.bf16.xpose.msra.mxu0 0
        %495 = vmatprep.subr.bf16.mxu0 0
        %496 = vmatpush1.bf16.xpose.msra.mxu0 0
        %497 = vmatprep.subr.bf16.mxu0 0
        %498 = vmatpush1.bf16.xpose.msra.mxu0 0
        %499 = vmatprep.mubr.bf16.mxu0 0
        %500 = vmatmul.mubr.bf16.gmra.mrb[0].mxu0 %v462
        %v501 = vpop.f32.mrb[0].mxu0
        %v502 = vadd.f32 0.0, %v501
        %v503 = vpop.f32.mrb[0].mxu0
        %v504 = vpop.f32.mrb[0].mxu0
        %v505 = vadd.f32 0.0, %v504
        %v506 = vpop.f32.mrb[0].mxu0
        %507 = vdwg.mxu0
        %v508 = vmul.f32 %v502, 0.35355338
        %v509 = vmul.f32 %v505, 0.35355338
        %v510 = vsel %vm456, %v508, -1000000.0
        %v511 = vsel %vm456, %v509, -1000000.0
        %vm512 = vcmask 130048
        %v513 = vsel %vm512, %v510, -inf
        %514 = vmax.xlane.f32.xlu0 %v513
        %v515 = vpop.xlane.xlu0 %514
        %v516 = vsel %vm512, %v511, -inf
        %517 = vmax.xlane.f32.xlu0 %v516
        %v518 = vpop.xlane.xlu0 %517
        %v519 = vsub.f32 %v510, %v515
        %v520 = vsub.f32 %v511, %v518
        %v521 = vmul.f32 %v519, 1.442695
        %v522 = vpow.pop %v521
        %v523 = vmul.f32 %v520, 1.442695
        %v524 = vpow.pop %v523
        %v525 = vsel %vm512, %v522, 0.0
        %526 = vadd.xlane.f32.xlu0 %v525
        %v527 = vpop.xlane.xlu0 %526
        %v528 = vsel %vm512, %v524, 0.0
        %529 = vadd.xlane.f32.xlu0 %v528
        %v530 = vpop.xlane.xlu0 %529
        %v531 = vrcp.pop %v527
        %v532 = vrcp.pop %v530
        %v533 = vmul.f32 %v522, %v531
        %v534 = vmul.f32 %v524, %v532
        %v535 = vpack.c.bf16 %v534, %v533
        %v537 = vsel %vm512, %v535, 0
        %539 = vmatprep.subr.bf16.mxu0 0
        %540 = vmatpush1.bf16.msra.mxu0 %v459
        %541 = vmatprep.subr.bf16.mxu0 0
        %542 = vmatpush1.bf16.msra.mxu0 0
        %543 = vmatprep.subr.bf16.mxu0 0
        %544 = vmatpush1.bf16.msra.mxu0 0
        %545 = vmatprep.subr.bf16.mxu0 0
        %546 = vmatpush1.bf16.msra.mxu0 0
        %547 = vmatprep.subr.bf16.mxu0 0
        %548 = vmatpush1.bf16.msra.mxu0 0
        %549 = vmatprep.subr.bf16.mxu0 0
        %550 = vmatpush1.bf16.msra.mxu0 0
        %551 = vmatprep.subr.bf16.mxu0 0
        %552 = vmatpush1.bf16.msra.mxu0 0
        %553 = vmatprep.subr.bf16.mxu0 0
        %554 = vmatpush1.bf16.msra.mxu0 0
        %555 = vmatprep.subr.bf16.mxu0 0
        %556 = vmatpush1.bf16.msra.mxu0 0
        %557 = vmatprep.subr.bf16.mxu0 0
        %558 = vmatpush1.bf16.msra.mxu0 0
        %559 = vmatprep.subr.bf16.mxu0 0
        %560 = vmatpush1.bf16.msra.mxu0 0
        %561 = vmatprep.subr.bf16.mxu0 0
        %562 = vmatpush1.bf16.msra.mxu0 0
        %563 = vmatprep.subr.bf16.mxu0 0
        %564 = vmatpush1.bf16.msra.mxu0 0
        %565 = vmatprep.subr.bf16.mxu0 0
        %566 = vmatpush1.bf16.msra.mxu0 0
        %567 = vmatprep.subr.bf16.mxu0 0
        %568 = vmatpush1.bf16.msra.mxu0 0
        %569 = vmatprep.subr.bf16.mxu0 0
        %570 = vmatpush1.bf16.msra.mxu0 0
        %571 = vmatprep.mubr.bf16.mxu0 0
        %572 = vmatmul.mubr.bf16.gmra.mrb[0].mxu0 %v537
        %v573 = vpop.f32.mrb[0].mxu0
        %v574 = vadd.f32 0.0, %v573
        %v575 = vpop.f32.mrb[0].mxu0
        %v576 = vpop.f32.mrb[0].mxu0
        %v577 = vadd.f32 0.0, %v576
        %v578 = vpop.f32.mrb[0].mxu0
        %579 = vdwg.mxu0
        %581 = vrot.lane.b32.xlu0 %v457, 120
        %v582 = vpop.permute.xlu0 %581
        %584 = vrot.lane.b32.xlu0 %v458, 120
        %v585 = vpop.permute.xlu0 %584
        %v587 = vsel %vm460, %v582, 0
        %v590 = vsel %vm460, %v585, 0
        %592 = vmatprep.subr.bf16.mxu0 0
        %593 = vmatpush1.bf16.xpose.msra.mxu0 %v590
        %594 = vmatprep.subr.bf16.mxu0 0
        %595 = vmatpush1.bf16.xpose.msra.mxu0 0
        %596 = vmatprep.subr.bf16.mxu0 0
        %597 = vmatpush1.bf16.xpose.msra.mxu0 0
        %598 = vmatprep.subr.bf16.mxu0 0
        %599 = vmatpush1.bf16.xpose.msra.mxu0 0
        %600 = vmatprep.subr.bf16.mxu0 0
        %601 = vmatpush1.bf16.xpose.msra.mxu0 0
        %602 = vmatprep.subr.bf16.mxu0 0
        %603 = vmatpush1.bf16.xpose.msra.mxu0 0
        %604 = vmatprep.subr.bf16.mxu0 0
        %605 = vmatpush1.bf16.xpose.msra.mxu0 0
        %606 = vmatprep.subr.bf16.mxu0 0
        %607 = vmatpush1.bf16.xpose.msra.mxu0 0
        %608 = vmatprep.subr.bf16.mxu0 0
        %609 = vmatpush1.bf16.xpose.msra.mxu0 0
        %610 = vmatprep.subr.bf16.mxu0 0
        %611 = vmatpush1.bf16.xpose.msra.mxu0 0
        %612 = vmatprep.subr.bf16.mxu0 0
        %613 = vmatpush1.bf16.xpose.msra.mxu0 0
        %614 = vmatprep.subr.bf16.mxu0 0
        %615 = vmatpush1.bf16.xpose.msra.mxu0 0
        %616 = vmatprep.subr.bf16.mxu0 0
        %617 = vmatpush1.bf16.xpose.msra.mxu0 0
        %618 = vmatprep.subr.bf16.mxu0 0
        %619 = vmatpush1.bf16.xpose.msra.mxu0 0
        %620 = vmatprep.subr.bf16.mxu0 0
        %621 = vmatpush1.bf16.xpose.msra.mxu0 0
        %622 = vmatprep.subr.bf16.mxu0 0
        %623 = vmatpush1.bf16.xpose.msra.mxu0 0
        %624 = vmatprep.mubr.bf16.mxu0 0
        %625 = vmatmul.mubr.bf16.gmra.mrb[0].mxu0 %v587
        %v626 = vpop.f32.mrb[0].mxu0
        %v627 = vadd.f32 0.0, %v626
        %v628 = vpop.f32.mrb[0].mxu0
        %v629 = vpop.f32.mrb[0].mxu0
        %v630 = vadd.f32 0.0, %v629
        %v631 = vpop.f32.mrb[0].mxu0
        %632 = vdwg.mxu0
        %v633 = vmul.f32 %v627, 0.35355338
        %v634 = vmul.f32 %v630, 0.35355338
        %v635 = vsel %vm456, %v633, -1000000.0
        %v636 = vsel %vm456, %v634, -1000000.0
        %v637 = vsel %vm512, %v635, -inf
        %638 = vmax.xlane.f32.xlu0 %v637
        %v639 = vpop.xlane.xlu0 %638
        %v640 = vsel %vm512, %v636, -inf
        %641 = vmax.xlane.f32.xlu0 %v640
        %v642 = vpop.xlane.xlu0 %641
        %v643 = vsub.f32 %v635, %v639
        %v644 = vsub.f32 %v636, %v642
        %v645 = vmul.f32 %v643, 1.442695
        %v646 = vpow.pop %v645
        %v647 = vmul.f32 %v644, 1.442695
        %v648 = vpow.pop %v647
        %v649 = vsel %vm512, %v646, 0.0
        %650 = vadd.xlane.f32.xlu0 %v649
        %v651 = vpop.xlane.xlu0 %650
        %v652 = vsel %vm512, %v648, 0.0
        %653 = vadd.xlane.f32.xlu0 %v652
        %v654 = vpop.xlane.xlu0 %653
        %v655 = vrcp.pop %v651
        %v656 = vrcp.pop %v654
        %v657 = vmul.f32 %v646, %v655
        %v658 = vmul.f32 %v648, %v656
        %v659 = vpack.c.bf16 %v658, %v657
        %661 = vrot.lane.b32.xlu0 %v459, 120
        %v662 = vpop.permute.xlu0 %661
        %v665 = vsel %vm512, %v659, 0
        %667 = vmatprep.subr.bf16.mxu0 0
        %668 = vmatpush1.bf16.msra.mxu0 %v662
        %669 = vmatprep.subr.bf16.mxu0 0
        %670 = vmatpush1.bf16.msra.mxu0 0
        %671 = vmatprep.subr.bf16.mxu0 0
        %672 = vmatpush1.bf16.msra.mxu0 0
        %673 = vmatprep.subr.bf16.mxu0 0
        %674 = vmatpush1.bf16.msra.mxu0 0
        %675 = vmatprep.subr.bf16.mxu0 0
        %676 = vmatpush1.bf16.msra.mxu0 0
        %677 = vmatprep.subr.bf16.mxu0 0
        %678 = vmatpush1.bf16.msra.mxu0 0
        %679 = vmatprep.subr.bf16.mxu0 0
        %680 = vmatpush1.bf16.msra.mxu0 0
        %681 = vmatprep.subr.bf16.mxu0 0
        %682 = vmatpush1.bf16.msra.mxu0 0
        %683 = vmatprep.subr.bf16.mxu0 0
        %684 = vmatpush1.bf16.msra.mxu0 0
        %685 = vmatprep.subr.bf16.mxu0 0
        %686 = vmatpush1.bf16.msra.mxu0 0
        %687 = vmatprep.subr.bf16.mxu0 0
        %688 = vmatpush1.bf16.msra.mxu0 0
        %689 = vmatprep.subr.bf16.mxu0 0
        %690 = vmatpush1.bf16.msra.mxu0 0
        %691 = vmatprep.subr.bf16.mxu0 0
        %692 = vmatpush1.bf16.msra.mxu0 0
        %693 = vmatprep.subr.bf16.mxu0 0
        %694 = vmatpush1.bf16.msra.mxu0 0
        %695 = vmatprep.subr.bf16.mxu0 0
        %696 = vmatpush1.bf16.msra.mxu0 0
        %697 = vmatprep.subr.bf16.mxu0 0
        %698 = vmatpush1.bf16.msra.mxu0 0
        %699 = vmatprep.mubr.bf16.mxu0 0
        %700 = vmatmul.mubr.bf16.gmra.mrb[0].mxu0 %v665
        %v701 = vpop.f32.mrb[0].mxu0
        %v702 = vadd.f32 0.0, %v701
        %v703 = vpop.f32.mrb[0].mxu0
        %v704 = vpop.f32.mrb[0].mxu0
        %v705 = vadd.f32 0.0, %v704
        %v706 = vpop.f32.mrb[0].mxu0
        %707 = vdwg.mxu0
        %708 = vrot.lane.b32.xlu0 %v457, 112
        %v709 = vpop.permute.xlu0 %708
        %710 = vrot.lane.b32.xlu0 %v458, 112
        %v711 = vpop.permute.xlu0 %710
        %v713 = vsel %vm460, %v709, 0
        %v716 = vsel %vm460, %v711, 0
        %718 = vmatprep.subr.bf16.mxu0 0
        %719 = vmatpush1.bf16.xpose.msra.mxu0 %v716
        %720 = vmatprep.subr.bf16.mxu0 0
        %721 = vmatpush1.bf16.xpose.msra.mxu0 0
        %722 = vmatprep.subr.bf16.mxu0 0
        %723 = vmatpush1.bf16.xpose.msra.mxu0 0
        %724 = vmatprep.subr.bf16.mxu0 0
        %725 = vmatpush1.bf16.xpose.msra.mxu0 0
        %726 = vmatprep.subr.bf16.mxu0 0
        %727 = vmatpush1.bf16.xpose.msra.mxu0 0
        %728 = vmatprep.subr.bf16.mxu0 0
        %729 = vmatpush1.bf16.xpose.msra.mxu0 0
        %730 = vmatprep.subr.bf16.mxu0 0
        %731 = vmatpush1.bf16.xpose.msra.mxu0 0
        %732 = vmatprep.subr.bf16.mxu0 0
        %733 = vmatpush1.bf16.xpose.msra.mxu0 0
        %734 = vmatprep.subr.bf16.mxu0 0
        %735 = vmatpush1.bf16.xpose.msra.mxu0 0
        %736 = vmatprep.subr.bf16.mxu0 0
        %737 = vmatpush1.bf16.xpose.msra.mxu0 0
        %738 = vmatprep.subr.bf16.mxu0 0
        %739 = vmatpush1.bf16.xpose.msra.mxu0 0
        %740 = vmatprep.subr.bf16.mxu0 0
        %741 = vmatpush1.bf16.xpose.msra.mxu0 0
        %742 = vmatprep.subr.bf16.mxu0 0
        %743 = vmatpush1.bf16.xpose.msra.mxu0 0
        %744 = vmatprep.subr.bf16.mxu0 0
        %745 = vmatpush1.bf16.xpose.msra.mxu0 0
        %746 = vmatprep.subr.bf16.mxu0 0
        %747 = vmatpush1.bf16.xpose.msra.mxu0 0
        %748 = vmatprep.subr.bf16.mxu0 0
        %749 = vmatpush1.bf16.xpose.msra.mxu0 0
        %750 = vmatprep.mubr.bf16.mxu0 0
        %751 = vmatmul.mubr.bf16.gmra.mrb[0].mxu0 %v713
        %v752 = vpop.f32.mrb[0].mxu0
        %v753 = vadd.f32 0.0, %v752
        %v754 = vpop.f32.mrb[0].mxu0
        %v755 = vpop.f32.mrb[0].mxu0
        %v756 = vadd.f32 0.0, %v755
        %v757 = vpop.f32.mrb[0].mxu0
        %758 = vdwg.mxu0
        %v759 = vmul.f32 %v753, 0.35355338
        %v760 = vmul.f32 %v756, 0.35355338
        %v761 = vsel %vm456, %v759, -1000000.0
        %v762 = vsel %vm456, %v760, -1000000.0
        %v763 = vsel %vm512, %v761, -inf
        %764 = vmax.xlane.f32.xlu0 %v763
        %v765 = vpop.xlane.xlu0 %764
        %v766 = vsel %vm512, %v762, -inf
        %767 = vmax.xlane.f32.xlu0 %v766
        %v768 = vpop.xlane.xlu0 %767
        %v769 = vsub.f32 %v761, %v765
        %v770 = vsub.f32 %v762, %v768
        %v771 = vmul.f32 %v769, 1.442695
        %v772 = vpow.pop %v771
        %v773 = vmul.f32 %v770, 1.442695
        %v774 = vpow.pop %v773
        %v775 = vsel %vm512, %v772, 0.0
        %776 = vadd.xlane.f32.xlu0 %v775
        %v777 = vpop.xlane.xlu0 %776
        %v778 = vsel %vm512, %v774, 0.0
        %779 = vadd.xlane.f32.xlu0 %v778
        %v780 = vpop.xlane.xlu0 %779
        %v781 = vrcp.pop %v777
        %v782 = vrcp.pop %v780
        %v783 = vmul.f32 %v772, %v781
        %v784 = vmul.f32 %v774, %v782
        %v785 = vpack.c.bf16 %v784, %v783
        %786 = vrot.lane.b32.xlu0 %v459, 112
        %v787 = vpop.permute.xlu0 %786
        %v790 = vsel %vm512, %v785, 0
        %792 = vmatprep.subr.bf16.mxu0 0
        %793 = vmatpush1.bf16.msra.mxu0 %v787
        %794 = vmatprep.subr.bf16.mxu0 0
        %795 = vmatpush1.bf16.msra.mxu0 0
        %796 = vmatprep.subr.bf16.mxu0 0
        %797 = vmatpush1.bf16.msra.mxu0 0
        %798 = vmatprep.subr.bf16.mxu0 0
        %799 = vmatpush1.bf16.msra.mxu0 0
        %800 = vmatprep.subr.bf16.mxu0 0
        %801 = vmatpush1.bf16.msra.mxu0 0
        %802 = vmatprep.subr.bf16.mxu0 0
        %803 = vmatpush1.bf16.msra.mxu0 0
        %804 = vmatprep.subr.bf16.mxu0 0
        %805 = vmatpush1.bf16.msra.mxu0 0
        %806 = vmatprep.subr.bf16.mxu0 0
        %807 = vmatpush1.bf16.msra.mxu0 0
        %808 = vmatprep.subr.bf16.mxu0 0
        %809 = vmatpush1.bf16.msra.mxu0 0
        %810 = vmatprep.subr.bf16.mxu0 0
        %811 = vmatpush1.bf16.msra.mxu0 0
        %812 = vmatprep.subr.bf16.mxu0 0
        %813 = vmatpush1.bf16.msra.mxu0 0
        %814 = vmatprep.subr.bf16.mxu0 0
        %815 = vmatpush1.bf16.msra.mxu0 0
        %816 = vmatprep.subr.bf16.mxu0 0
        %817 = vmatpush1.bf16.msra.mxu0 0
        %818 = vmatprep.subr.bf16.mxu0 0
        %819 = vmatpush1.bf16.msra.mxu0 0
        %820 = vmatprep.subr.bf16.mxu0 0
        %821 = vmatpush1.bf16.msra.mxu0 0
        %822 = vmatprep.subr.bf16.mxu0 0
        %823 = vmatpush1.bf16.msra.mxu0 0
        %824 = vmatprep.mubr.bf16.mxu0 0
        %825 = vmatmul.mubr.bf16.gmra.mrb[0].mxu0 %v790
        %v826 = vpop.f32.mrb[0].mxu0
        %v827 = vadd.f32 0.0, %v826
        %v828 = vpop.f32.mrb[0].mxu0
        %v829 = vpop.f32.mrb[0].mxu0
        %v830 = vadd.f32 0.0, %v829
        %v831 = vpop.f32.mrb[0].mxu0
        %832 = vdwg.mxu0
        %833 = vrot.lane.b32.xlu0 %v457, 104
        %v834 = vpop.permute.xlu0 %833
        %835 = vrot.lane.b32.xlu0 %v458, 104
        %v836 = vpop.permute.xlu0 %835
        %v838 = vsel %vm460, %v834, 0
        %v841 = vsel %vm460, %v836, 0
        %843 = vmatprep.subr.bf16.mxu0 0
        %844 = vmatpush1.bf16.xpose.msra.mxu0 %v841
        %845 = vmatprep.subr.bf16.mxu0 0
        %846 = vmatpush1.bf16.xpose.msra.mxu0 0
        %847 = vmatprep.subr.bf16.mxu0 0
        %848 = vmatpush1.bf16.xpose.msra.mxu0 0
        %849 = vmatprep.subr.bf16.mxu0 0
        %850 = vmatpush1.bf16.xpose.msra.mxu0 0
        %851 = vmatprep.subr.bf16.mxu0 0
        %852 = vmatpush1.bf16.xpose.msra.mxu0 0
        %853 = vmatprep.subr.bf16.mxu0 0
        %854 = vmatpush1.bf16.xpose.msra.mxu0 0
        %855 = vmatprep.subr.bf16.mxu0 0
        %856 = vmatpush1.bf16.xpose.msra.mxu0 0
        %857 = vmatprep.subr.bf16.mxu0 0
        %858 = vmatpush1.bf16.xpose.msra.mxu0 0
        %859 = vmatprep.subr.bf16.mxu0 0
        %860 = vmatpush1.bf16.xpose.msra.mxu0 0
        %861 = vmatprep.subr.bf16.mxu0 0
        %862 = vmatpush1.bf16.xpose.msra.mxu0 0
        %863 = vmatprep.subr.bf16.mxu0 0
        %864 = vmatpush1.bf16.xpose.msra.mxu0 0
        %865 = vmatprep.subr.bf16.mxu0 0
        %866 = vmatpush1.bf16.xpose.msra.mxu0 0
        %867 = vmatprep.subr.bf16.mxu0 0
        %868 = vmatpush1.bf16.xpose.msra.mxu0 0
        %869 = vmatprep.subr.bf16.mxu0 0
        %870 = vmatpush1.bf16.xpose.msra.mxu0 0
        %871 = vmatprep.subr.bf16.mxu0 0
        %872 = vmatpush1.bf16.xpose.msra.mxu0 0
        %873 = vmatprep.subr.bf16.mxu0 0
        %874 = vmatpush1.bf16.xpose.msra.mxu0 0
        %875 = vmatprep.mubr.bf16.mxu0 0
        %876 = vmatmul.mubr.bf16.gmra.mrb[0].mxu0 %v838
        %v877 = vpop.f32.mrb[0].mxu0
        %v878 = vadd.f32 0.0, %v877
        %v879 = vpop.f32.mrb[0].mxu0
        %v880 = vpop.f32.mrb[0].mxu0
        %v881 = vadd.f32 0.0, %v880
        %v882 = vpop.f32.mrb[0].mxu0
        %883 = vdwg.mxu0
        %v884 = vmul.f32 %v878, 0.35355338
        %v885 = vmul.f32 %v881, 0.35355338
        %v886 = vsel %vm456, %v884, -1000000.0
        %v887 = vsel %vm456, %v885, -1000000.0
        %v888 = vsel %vm512, %v886, -inf
        %889 = vmax.xlane.f32.xlu0 %v888
        %v890 = vpop.xlane.xlu0 %889
        %v891 = vsel %vm512, %v887, -inf
        %892 = vmax.xlane.f32.xlu0 %v891
        %v893 = vpop.xlane.xlu0 %892
        %v894 = vsub.f32 %v886, %v890
        %v895 = vsub.f32 %v887, %v893
        %v896 = vmul.f32 %v894, 1.442695
        %v897 = vpow.pop %v896
        %v898 = vmul.f32 %v895, 1.442695
        %v899 = vpow.pop %v898
        %v900 = vsel %vm512, %v897, 0.0
        %901 = vadd.xlane.f32.xlu0 %v900
        %v902 = vpop.xlane.xlu0 %901
        %v903 = vsel %vm512, %v899, 0.0
        %904 = vadd.xlane.f32.xlu0 %v903
        %v905 = vpop.xlane.xlu0 %904
        %v906 = vrcp.pop %v902
        %v907 = vrcp.pop %v905
        %v908 = vmul.f32 %v897, %v906
        %v909 = vmul.f32 %v899, %v907
        %v910 = vpack.c.bf16 %v909, %v908
        %911 = vrot.lane.b32.xlu0 %v459, 104
        %v912 = vpop.permute.xlu0 %911
        %v915 = vsel %vm512, %v910, 0
        %917 = vmatprep.subr.bf16.mxu0 0
        %918 = vmatpush1.bf16.msra.mxu0 %v912
        %919 = vmatprep.subr.bf16.mxu0 0
        %920 = vmatpush1.bf16.msra.mxu0 0
        %921 = vmatprep.subr.bf16.mxu0 0
        %922 = vmatpush1.bf16.msra.mxu0 0
        %923 = vmatprep.subr.bf16.mxu0 0
        %924 = vmatpush1.bf16.msra.mxu0 0
        %925 = vmatprep.subr.bf16.mxu0 0
        %926 = vmatpush1.bf16.msra.mxu0 0
        %927 = vmatprep.subr.bf16.mxu0 0
        %928 = vmatpush1.bf16.msra.mxu0 0
        %929 = vmatprep.subr.bf16.mxu0 0
        %930 = vmatpush1.bf16.msra.mxu0 0
        %931 = vmatprep.subr.bf16.mxu0 0
        %932 = vmatpush1.bf16.msra.mxu0 0
        %933 = vmatprep.subr.bf16.mxu0 0
        %934 = vmatpush1.bf16.msra.mxu0 0
        %935 = vmatprep.subr.bf16.mxu0 0
        %936 = vmatpush1.bf16.msra.mxu0 0
        %937 = vmatprep.subr.bf16.mxu0 0
        %938 = vmatpush1.bf16.msra.mxu0 0
        %939 = vmatprep.subr.bf16.mxu0 0
        %940 = vmatpush1.bf16.msra.mxu0 0
        %941 = vmatprep.subr.bf16.mxu0 0
        %942 = vmatpush1.bf16.msra.mxu0 0
        %943 = vmatprep.subr.bf16.mxu0 0
        %944 = vmatpush1.bf16.msra.mxu0 0
        %945 = vmatprep.subr.bf16.mxu0 0
        %946 = vmatpush1.bf16.msra.mxu0 0
        %947 = vmatprep.subr.bf16.mxu0 0
        %948 = vmatpush1.bf16.msra.mxu0 0
        %949 = vmatprep.mubr.bf16.mxu0 0
        %950 = vmatmul.mubr.bf16.gmra.mrb[0].mxu0 %v915
        %v951 = vpop.f32.mrb[0].mxu0
        %v952 = vadd.f32 0.0, %v951
        %v953 = vpop.f32.mrb[0].mxu0
        %v954 = vpop.f32.mrb[0].mxu0
        %v955 = vadd.f32 0.0, %v954
        %v956 = vpop.f32.mrb[0].mxu0
        %957 = vdwg.mxu0
        %960 = vrot.lane.b32.xlu0 %v702, 8
        %v961 = vpop.permute.xlu0 %960
        %962 = vrot.lane.b32.xlu0 %v705, 8
        %v963 = vpop.permute.xlu0 %962
        %968 = vrot.lane.b32.xlu0 %v827, 16
        %v969 = vpop.permute.xlu0 %968
        %970 = vrot.lane.b32.xlu0 %v830, 16
        %v971 = vpop.permute.xlu0 %970
        %976 = vrot.lane.b32.xlu0 %v952, 24
        %v977 = vpop.permute.xlu0 %976
        %978 = vrot.lane.b32.xlu0 %v955, 24
        %v979 = vpop.permute.xlu0 %978
        %v982 = vsel %vm460, %v574, %v961
        %v983 = vsel %vm460, %v577, %v963
        %v984 = vsel %vm512, %v982, %v969
        %v985 = vsel %vm512, %v983, %v971
        %vm986 = vcmask 195584
        %v987 = vsel %vm986, %v984, %v977
        %v988 = vsel %vm986, %v985, %v979
        %v989 = vpack.c.bf16 %v988, %v987
        %v994 = vunpack.c.l.b16 %v278
        %v995 = vunpack.c.l.b16 %v279
        %v996 = vunpack.c.l.b16 %v280
        %v997 = vunpack.c.l.b16 %v281
        %v998 = vpack.c.b16 %v995, %v994
        %v999 = vpack.c.b16 %v997, %v996
        %vm1002 = vcmask 261120
        %v1004 = vsel %vm1002, %v989, 0
        %1006 = vmatprep.subr.bf16.mxu0 0
        %1007 = vmatpush1.bf16.msra.mxu0 %v998
        %1008 = vmatprep.subr.bf16.mxu0 0
        %1009 = vmatpush1.bf16.msra.mxu0 %v999
        %1010 = vmatprep.subr.bf16.mxu0 0
        %1011 = vmatpush1.bf16.msra.mxu0 0
        %1012 = vmatprep.subr.bf16.mxu0 0
        %1013 = vmatpush1.bf16.msra.mxu0 0
        %1014 = vmatprep.subr.bf16.mxu0 0
        %1015 = vmatpush1.bf16.msra.mxu0 0
        %1016 = vmatprep.subr.bf16.mxu0 0
        %1017 = vmatpush1.bf16.msra.mxu0 0
        %1018 = vmatprep.subr.bf16.mxu0 0
        %1019 = vmatpush1.bf16.msra.mxu0 0
        %1020 = vmatprep.subr.bf16.mxu0 0
        %1021 = vmatpush1.bf16.msra.mxu0 0
        %1022 = vmatprep.subr.bf16.mxu0 0
        %1023 = vmatpush1.bf16.msra.mxu0 0
        %1024 = vmatprep.subr.bf16.mxu0 0
        %1025 = vmatpush1.bf16.msra.mxu0 0
        %1026 = vmatprep.subr.bf16.mxu0 0
        %1027 = vmatpush1.bf16.msra.mxu0 0
        %1028 = vmatprep.subr.bf16.mxu0 0
        %1029 = vmatpush1.bf16.msra.mxu0 0
        %1030 = vmatprep.subr.bf16.mxu0 0
        %1031 = vmatpush1.bf16.msra.mxu0 0
        %1032 = vmatprep.subr.bf16.mxu0 0
        %1033 = vmatpush1.bf16.msra.mxu0 0
        %1034 = vmatprep.subr.bf16.mxu0 0
        %1035 = vmatpush1.bf16.msra.mxu0 0
        %1036 = vmatprep.subr.bf16.mxu0 0
        %1037 = vmatpush1.bf16.msra.mxu0 0
        %1038 = vmatprep.mubr.bf16.mxu0 0
        %1039 = vmatmul.mubr.bf16.gmra.mrb[0].mxu0 %v1004
        %v1040 = vpop.f32.mrb[0].mxu0
        %v1041 = vadd.f32 0.0, %v1040
        %v1042 = vpop.f32.mrb[0].mxu0
        %v1043 = vpop.f32.mrb[0].mxu0
        %v1044 = vadd.f32 0.0, %v1043
        %v1045 = vpop.f32.mrb[0].mxu0
        %1046 = vdwg.mxu0
        %1047 = vst.msk [vmem:[%s254] sm:$0xff] %vm1002, %v1041
        %1048 = vst.msk [vmem:[%s254 + $0x8] sm:$0xff] %vm1002, %v1044
        %s1049 = sand.u32 %s154, 1
        %s1050 = scalar_lea.sflag [#allocation5], %s1049
        %s1051 = sand.u32 %s154, 1
        %s1052 = smul.addr %s1051, 16
        %s1053 = scalar_lea.vmem [#allocation4], %s1052
        // Predicated region
        $region41: #{multi_head_attention_forward.1} parent=39 // pred_check
          %p1054 = pneg %p164
        $region42: #{multi_head_attention_forward.1} parent=39 // pred_check_branch
          %1056 = sbr.rel (%p1054) target = $region44
        $region43: #{multi_head_attention_forward.1} parent=39 // pred_region
          %s1058 = ssub.s32 256, 256
          %1059 = vsyncadd %s1050, %s1058
          %s1060 = smul.addr %s26, 2
          %s1061 = smul.addr %s1060, 128
          %s1062 = scalar_lea.hbm %s6, %s1061
          %s1063 = sshll.u32 %s1053, 4
          %s1064 = int_to_ptr.vmem [resolvable:$true] %s1063
          %1069 = dma.vmem_to_hbm [thread:$0]  %s1064, 256, %s1062, %s1050, 128, 128, 8
        $region44: #{multi_head_attention_forward.1} parent=39 // pred_fallthru
          _
      $region40: #{multi_head_attention_forward.1} parent=5 // pred_fallthru
        _
      %p1070 = scmp.le.s32.totalorder 2, %s21
      // Predicated region
      $region45: #{multi_head_attention_forward.1} parent=5 // pred_check
        %p1071 = pneg %p1070
      $region46: #{multi_head_attention_forward.1} parent=5 // pred_check_branch
        %1073 = sbr.rel (%p1071) target = $region48
      $region47: #{multi_head_attention_forward.1} parent=5 // pred_region
        %s1074 = ssub.s32 %s21, 2
        // Predicated region
        $region49: #{multi_head_attention_forward.1} parent=47 // pred_check
          %p1075 = pneg %p170
        $region50: #{multi_head_attention_forward.1} parent=47 // pred_check_branch
          %1077 = sbr.rel (%p1075) target = $region52
        $region51: #{multi_head_attention_forward.1} parent=47 // pred_region
          %s1078 = sand.u32 %s155, 1
          %s1079 = scalar_lea.sflag [#allocation5], %s1078
          %s1080 = sand.u32 %s155, 1
          %s1081 = smul.addr %s1080, 16
          %s1082 = scalar_lea.vmem [#allocation4], %s1081
          %1083 = dma.done %s1079, 256
        $region52: #{multi_head_attention_forward.1} parent=47 // pred_fallthru
          _
      $region48: #{multi_head_attention_forward.1} parent=5 // pred_fallthru
        _
    $region6: #{multi_head_attention_forward.1} parent=1 // loop_footer
      %s25 = sadd.s32 1, %s21
    $region7: #{multi_head_attention_forward.1} parent=1 // loop_footer_branch
      %20 = sbr.rel target = $region3
    $region8: #{multi_head_attention_forward.1} parent=1 // loop_exit
      _
    %1084 = vsyncpa [#allocation5], 1
    %s1085 = scalar_lea.sflag [#allocation5], 1
    %1086 = vsyncpa %s1085, 1

</llo_original>
